<compile_context>
chip_gen: v5e
topology: v5e:2x2
jax: 0.10.0
libtpu: 0.0.40
codegen_flags: <defaults>
</compile_context>

<pallas_src>
import functools

import jax
import jax.numpy as jnp
from jax.experimental import pallas as pl
from jax.experimental.pallas import tpu as pltpu

_LANE = 128      # lane width: last-dim padding target
_SUBLANE = 8     # sublane count: batch padding target


def _round_up(x, m):
    return ((x + m - 1) // m) * m


# ---------------------------------------------------------------------------
# Fused Pallas kernel: (Linear -> bias -> act) x n_hidden, then bias-free
# Linear.  refs = (x, w0, b0, w1, b1, ..., w_final, out).
# The running activation stays in vregs / VMEM for the whole chain.
# Matmul feed is the (bf16) weight dtype; accumulation + bias + act are f32.
# ---------------------------------------------------------------------------
def _mlp_fused_kernel(*refs, n_hidden, act):
    x_ref = refs[0]
    out_ref = refs[-1]
    prm = refs[1:-1]

    h = x_ref[...]                                       # already compute dtype
    for i in range(n_hidden):
        w = prm[2 * i][...]
        b = prm[2 * i + 1][...]                          # f32
        z = jnp.dot(h.astype(w.dtype), w, preferred_element_type=jnp.float32)
        h = act(z + b)                                   # f32 bias + activation
    wf = prm[2 * n_hidden][...]
    y = jnp.dot(h.astype(wf.dtype), wf, preferred_element_type=jnp.float32)
    out_ref[...] = y.astype(out_ref.dtype)


# ---------------------------------------------------------------------------
# One-time parameter preparation (hoisted out of the forward path):
# zero-pad every weight to lane-aligned (in_p, out_p) in the compute dtype,
# keep biases padded in f32.  Zero-padded ROWS keep the math exact.
# ---------------------------------------------------------------------------
def prepare_mlp_params(params, compute_dtype=jnp.bfloat16):
    hidden = params["hidden"]
    wf = params["final_w"]

    K0 = hidden[0][0].shape[0] if hidden else wf.shape[0]
    kin, kin_p = K0, _round_up(K0, _LANE)

    padded_hidden = []
    for (w, b) in hidden:
        K, N = w.shape
        assert K == kin, "layer shapes must chain"
        Np = _round_up(N, _LANE)
        w_p = jnp.zeros((kin_p, Np), compute_dtype).at[:K, :N].set(
            w.astype(compute_dtype))
        b_p = jnp.zeros((1, Np), jnp.float32).at[0, :N].set(
            b.astype(jnp.float32))
        padded_hidden.append((w_p, b_p))
        kin, kin_p = N, Np

    Kf, Nf = wf.shape
    assert Kf == kin
    Nfp = _round_up(Nf, _LANE)
    wf_p = jnp.zeros((kin_p, Nfp), compute_dtype).at[:Kf, :Nf].set(
        wf.astype(compute_dtype))

    return {
        "hidden": padded_hidden,
        "final_w": wf_p,
        "in_features": K0,
        "out_features": Nf,
        "compute_dtype": compute_dtype,
    }


# ---------------------------------------------------------------------------
# Forward: single pallas_call over a batch-tiled grid.
# ---------------------------------------------------------------------------
def mlp_forward_pallas(prepared, x, act, *, out_dtype=None, tm_max=256,
                       ensure_two_grid_steps=True,
                       act_transcendentals_per_elem=0):
    hidden = prepared["hidden"]
    wf_p = prepared["final_w"]
    cdt = prepared["compute_dtype"]
    K0 = prepared["in_features"]
    Nf = prepared["out_features"]

    B = x.shape[0]
    assert x.shape[1] == K0, "input feature dim mismatch"
    odt = out_dtype if out_dtype is not None else x.dtype

    K0p = hidden[0][0].shape[0] if hidden else wf_p.shape[0]
    Nfp = wf_p.shape[1]

    # ---- batch tiling: sublane-pad only; cdiv grid (no round_up to tm) ----
    B_pad = _round_up(B, _SUBLANE)
    tm = min(tm_max, B_pad)
    # Give v7x's second TensorCore work when the whole batch would otherwise
    # fit in a single grid step (no-op cost on 1-TC v5e/v6e).
    if ensure_two_grid_steps and B_pad >= 2 * _SUBLANE and B_pad <= tm:
        tm = _round_up(pl.cdiv(B_pad, 2), _SUBLANE)
    grid_m = pl.cdiv(B_pad, tm)

    # Lane-dense, sublane-padded input, pre-cast to the compute dtype so the
    # per-tile DMA is half-width and no in-kernel cast is needed for layer 0.
    x_p = jnp.zeros((B_pad, K0p), cdt).at[:B, :K0].set(x.astype(cdt))

    # ---- cost / VMEM accounting (padded dims) ----
    cdt_size = jnp.dtype(cdt).itemsize
    out_size = jnp.dtype(odt).itemsize
    flops = 0
    trans = 0
    kin_p = K0p
    widths = [K0p]
    for (w_p, _) in hidden:
        Np = w_p.shape[1]
        flops += 2 * B_pad * kin_p * Np
        trans += act_transcendentals_per_elem * B_pad * Np
        kin_p = Np
        widths.append(Np)
    flops += 2 * B_pad * kin_p * Nfp
    widths.append(Nfp)

    weight_bytes = (sum(int(w.size) * w.dtype.itemsize for (w, _) in hidden)
                    + int(wf_p.size) * wf_p.dtype.itemsize)
    bias_bytes = sum(int(b.size) * b.dtype.itemsize for (_, b) in hidden)
    io_tile_bytes = 2 * (tm * K0p * cdt_size + tm * Nfp * out_size)  # dbl-buf x/out
    act_bytes = 6 * tm * max(widths) * 4                             # f32 intermediates
    vmem_need = weight_bytes + bias_bytes + io_tile_bytes + act_bytes
    if vmem_need > (56 << 20):
        # TODO(synk): for very wide layers, chunk the widest layer's K/N with
        # pltpu.emit_pipeline instead of fully-resident weight blocks.
        raise ValueError(
            f"fused-MLP weight set ({vmem_need/2**20:.1f} MiB) does not fit "
            "VMEM; needs a chunked-pipeline fallback")
    vmem_limit = int(min(max(2 * vmem_need + (4 << 20), 32 << 20), 64 << 20))

    bytes_accessed = int(
        int(x_p.size) * cdt_size + weight_bytes + bias_bytes
        + B_pad * Nfp * out_size)

    kernel = functools.partial(_mlp_fused_kernel, n_hidden=len(hidden), act=act)

    def _const_spec(shape, single_buffer):
        # Constant (0,0) index map -> same block every grid step; single
        # buffering halves the resident weight VMEM (matters on v7x).
        if single_buffer:
            return pl.BlockSpec(shape, lambda i: (0, 0),
                                pipeline_mode=pl.Buffered(1))
        return pl.BlockSpec(shape, lambda i: (0, 0))

    def _run(single_buffer_weights):
        inputs = [x_p]
        specs = [pl.BlockSpec((tm, K0p), lambda i: (i, 0))]
        for (w_p, b_p) in hidden:
            inputs += [w_p, b_p]
            specs += [_const_spec(w_p.shape, single_buffer_weights),
                      _const_spec(b_p.shape, single_buffer_weights)]
        inputs.append(wf_p)
        specs.append(_const_spec(wf_p.shape, single_buffer_weights))

        return pl.pallas_call(
            kernel,
            out_shape=jax.ShapeDtypeStruct((B_pad, Nfp), odt),
            grid=(grid_m,),
            in_specs=specs,
            out_specs=pl.BlockSpec((tm, Nfp), lambda i: (i, 0)),
            compiler_params=pltpu.CompilerParams(
                dimension_semantics=("parallel",),
                vmem_limit_bytes=vmem_limit),
            cost_estimate=pl.CostEstimate(
                flops=flops, transcendentals=trans,
                bytes_accessed=bytes_accessed),
        )(*inputs)

    try:
        out_p = _run(True)
    except Exception:
        # Fallback if this JAX build rejects single-buffered constant blocks.
        out_p = _run(False)

    # Strip batch/lane padding.
    return out_p[:B, :Nf]


# ---------------------------------------------------------------------------
# Parameter init: mirrors the PyTorch module's layer shapes (weights stored
# pre-transposed to (in_features, out_features)).
# ---------------------------------------------------------------------------
def init_mlp_params(key, input_shape, hidden_shapes, output_shape, bias=True,
                    dtype=jnp.float32):
    params = {"hidden": [], "final_w": None}
    dims = [input_shape] + list(hidden_shapes)
    for i in range(len(hidden_shapes)):
        key, kw, kb = jax.random.split(key, 3)
        fan_in, fan_out = dims[i], dims[i + 1]
        bound = 1.0 / jnp.sqrt(jnp.asarray(fan_in, dtype))
        w = jax.random.uniform(kw, (fan_in, fan_out), dtype, -bound, bound)
        b = (jax.random.uniform(kb, (fan_out,), dtype, -bound, bound)
             if bias else jnp.zeros((fan_out,), dtype))
        params["hidden"].append((w, b))
    key, kw = jax.random.split(key)
    fan_in = hidden_shapes[-1]
    bound = 1.0 / jnp.sqrt(jnp.asarray(fan_in, dtype))
    params["final_w"] = jax.random.uniform(
        kw, (fan_in, output_shape), dtype, -bound, bound)
    return params


# ---------------------------------------------------------------------------
if __name__ == "__main__":
    # Small shapes consistent with the module's constructor.
    batch = 4
    input_shape = 16
    hidden_shapes = [32, 32]
    output_shape = 8

    key = jax.random.PRNGKey(0)
    key, kx = jax.random.split(key)
    x = jax.random.normal(kx, (batch, input_shape), jnp.float32)

    params = init_mlp_params(key, input_shape, hidden_shapes, output_shape,
                             bias=True)

    # `act` is the Callable argument of forward(); leaky_relu as in the
    # typical use of this PyTorch module (elementwise — required, see NOTE).
    act = lambda y: jax.nn.leaky_relu(y, negative_slope=0.01)

    # Pad / cast the parameters ONCE (outside the per-forward path).
    prepared = prepare_mlp_params(params, compute_dtype=jnp.bfloat16)

    out = mlp_forward_pallas(prepared, x, act)
    out = jax.block_until_ready(out)

    # Pure-JAX references.
    def ref_forward(xx, feed_dtype):
        h = xx
        for (w, b) in params["hidden"]:
            z = jnp.dot(h.astype(feed_dtype), w.astype(feed_dtype),
                        preferred_element_type=jnp.float32)
            h = act(z + b.astype(jnp.float32))
        return jnp.dot(h.astype(feed_dtype),
                       params["final_w"].astype(feed_dtype),
                       preferred_element_type=jnp.float32)

    ref_matched = ref_forward(x, jnp.bfloat16)   # same numerics as the kernel
    ref_f32 = ref_forward(x, jnp.float32)        # module's f32 semantics

    assert out.shape == (batch, output_shape)
    o = out.astype(jnp.float32)
    assert jnp.allclose(o, ref_matched, atol=5e-3, rtol=5e-3), (
        float(jnp.max(jnp.abs(o - ref_matched))))
    assert jnp.allclose(o, ref_f32, atol=5e-2, rtol=5e-2), (
        float(jnp.max(jnp.abs(o - ref_f32))))

    print("KERNEL_OK")
</pallas_src>

<mosaic_0001>
module attributes {stable_mosaic.version = 11 : i64} {
  func.func @_mlp_fused_kernel(%arg0: i32, %arg1: memref<8x128xbf16, #tpu.memory_space<vmem>>, %arg2: memref<128x128xbf16, #tpu.memory_space<vmem>>, %arg3: memref<1x128xf32, #tpu.memory_space<vmem>>, %arg4: memref<128x128xbf16, #tpu.memory_space<vmem>>, %arg5: memref<1x128xf32, #tpu.memory_space<vmem>>, %arg6: memref<128x128xbf16, #tpu.memory_space<vmem>>, %arg7: memref<8x128xf32, #tpu.memory_space<vmem>>) attributes {dimension_semantics = [#tpu.dimension_semantics<parallel>], iteration_bounds = array<i64: 1>, scalar_prefetch = 0 : i64, scratch_operands = 0 : i64, tpu.core_type = #tpu.core_type<tc>, window_params = [{transform_indices = @transform_0, window_bounds = array<i64: 8, 128>}, {pipeline_mode = #tpu.pipeline_mode<synchronous>, transform_indices = @transform_1, window_bounds = array<i64: 128, 128>}, {pipeline_mode = #tpu.pipeline_mode<synchronous>, transform_indices = @transform_2, window_bounds = array<i64: 1, 128>}, {pipeline_mode = #tpu.pipeline_mode<synchronous>, transform_indices = @transform_3, window_bounds = array<i64: 128, 128>}, {pipeline_mode = #tpu.pipeline_mode<synchronous>, transform_indices = @transform_4, window_bounds = array<i64: 1, 128>}, {pipeline_mode = #tpu.pipeline_mode<synchronous>, transform_indices = @transform_5, window_bounds = array<i64: 128, 128>}, {transform_indices = @transform_6, window_bounds = array<i64: 8, 128>}]} {
    %c0 = arith.constant 0 : index
    %c0_0 = arith.constant 0 : index
    %0 = vector.load %arg1[%c0, %c0_0] : memref<8x128xbf16, #tpu.memory_space<vmem>>, vector<8x128xbf16>
    %c0_1 = arith.constant 0 : index
    %c0_2 = arith.constant 0 : index
    %1 = vector.load %arg2[%c0_1, %c0_2] : memref<128x128xbf16, #tpu.memory_space<vmem>>, vector<128x128xbf16>
    %c0_3 = arith.constant 0 : index
    %c0_4 = arith.constant 0 : index
    %2 = vector.load %arg3[%c0_3, %c0_4] : memref<1x128xf32, #tpu.memory_space<vmem>>, vector<1x128xf32>
    %cst = arith.constant dense<0.000000e+00> : vector<8x128xf32>
    %3 = tpu.matmul %0, %1, %cst {dimension_numbers = #tpu.dot_dimension_numbers<[1], [0], [0], [1], [0, 0, 1, 1], [], []>} : vector<8x128xbf16>, vector<128x128xbf16>, vector<8x128xf32> -> vector<8x128xf32>
    %4 = vector.broadcast %2 : vector<1x128xf32> to vector<8x128xf32>
    %5 = arith.addf %3, %4 : vector<8x128xf32>
    %cst_5 = arith.constant 0.00999999977 : f32
    %cst_6 = arith.constant 0.000000e+00 : f32
    %6 = vector.broadcast %cst_6 : f32 to vector<8x128xf32>
    %7 = arith.cmpf oge, %5, %6 : vector<8x128xf32>
    %8 = vector.broadcast %cst_5 : f32 to vector<8x128xf32>
    %9 = arith.mulf %8, %5 : vector<8x128xf32>
    %10 = arith.select %7, %5, %9 : vector<8x128xi1>, vector<8x128xf32>
    %c0_7 = arith.constant 0 : index
    %c0_8 = arith.constant 0 : index
    %11 = vector.load %arg4[%c0_7, %c0_8] : memref<128x128xbf16, #tpu.memory_space<vmem>>, vector<128x128xbf16>
    %c0_9 = arith.constant 0 : index
    %c0_10 = arith.constant 0 : index
    %12 = vector.load %arg5[%c0_9, %c0_10] : memref<1x128xf32, #tpu.memory_space<vmem>>, vector<1x128xf32>
    %13 = arith.truncf %10 : vector<8x128xf32> to vector<8x128xbf16>
    %cst_11 = arith.constant dense<0.000000e+00> : vector<8x128xf32>
    %14 = tpu.matmul %13, %11, %cst_11 {dimension_numbers = #tpu.dot_dimension_numbers<[1], [0], [0], [1], [0, 0, 1, 1], [], []>} : vector<8x128xbf16>, vector<128x128xbf16>, vector<8x128xf32> -> vector<8x128xf32>
    %15 = vector.broadcast %12 : vector<1x128xf32> to vector<8x128xf32>
    %16 = arith.addf %14, %15 : vector<8x128xf32>
    %cst_12 = arith.constant 0.00999999977 : f32
    %cst_13 = arith.constant 0.000000e+00 : f32
    %17 = vector.broadcast %cst_13 : f32 to vector<8x128xf32>
    %18 = arith.cmpf oge, %16, %17 : vector<8x128xf32>
    %19 = vector.broadcast %cst_12 : f32 to vector<8x128xf32>
    %20 = arith.mulf %19, %16 : vector<8x128xf32>
    %21 = arith.select %18, %16, %20 : vector<8x128xi1>, vector<8x128xf32>
    %c0_14 = arith.constant 0 : index
    %c0_15 = arith.constant 0 : index
    %22 = vector.load %arg6[%c0_14, %c0_15] : memref<128x128xbf16, #tpu.memory_space<vmem>>, vector<128x128xbf16>
    %23 = arith.truncf %21 : vector<8x128xf32> to vector<8x128xbf16>
    %cst_16 = arith.constant dense<0.000000e+00> : vector<8x128xf32>
    %24 = tpu.matmul %23, %22, %cst_16 {dimension_numbers = #tpu.dot_dimension_numbers<[1], [0], [0], [1], [0, 0, 1, 1], [], []>} : vector<8x128xbf16>, vector<128x128xbf16>, vector<8x128xf32> -> vector<8x128xf32>
    %c0_17 = arith.constant 0 : index
    %c0_18 = arith.constant 0 : index
    %25 = vector.load %arg7[%c0_17, %c0_18] : memref<8x128xf32, #tpu.memory_space<vmem>>, vector<8x128xf32>
    tpu.vector_store %arg7[%c0_17, %c0_18], %24 {strides = array<i32>} : memref<8x128xf32, #tpu.memory_space<vmem>>, vector<8x128xf32>,
    return
  }
  func.func @transform_0(%arg0: i32) -> (i32, i32) {
    %c0_i32 = arith.constant 0 : i32
    %c0_i32_0 = arith.constant 0 : i32
    return %arg0, %c0_i32 : i32, i32
  }
  func.func @transform_1(%arg0: i32) -> (i32, i32) {
    %c0_i32 = arith.constant 0 : i32
    %c0_i32_0 = arith.constant 0 : i32
    %c0_i32_1 = arith.constant 0 : i32
    return %c0_i32, %c0_i32_0 : i32, i32
  }
  func.func @transform_2(%arg0: i32) -> (i32, i32) {
    %c0_i32 = arith.constant 0 : i32
    %c0_i32_0 = arith.constant 0 : i32
    %c0_i32_1 = arith.constant 0 : i32
    return %c0_i32, %c0_i32_0 : i32, i32
  }
  func.func @transform_3(%arg0: i32) -> (i32, i32) {
    %c0_i32 = arith.constant 0 : i32
    %c0_i32_0 = arith.constant 0 : i32
    %c0_i32_1 = arith.constant 0 : i32
    return %c0_i32, %c0_i32_0 : i32, i32
  }
  func.func @transform_4(%arg0: i32) -> (i32, i32) {
    %c0_i32 = arith.constant 0 : i32
    %c0_i32_0 = arith.constant 0 : i32
    %c0_i32_1 = arith.constant 0 : i32
    return %c0_i32, %c0_i32_0 : i32, i32
  }
  func.func @transform_5(%arg0: i32) -> (i32, i32) {
    %c0_i32 = arith.constant 0 : i32
    %c0_i32_0 = arith.constant 0 : i32
    %c0_i32_1 = arith.constant 0 : i32
    return %c0_i32, %c0_i32_0 : i32, i32
  }
  func.func @transform_6(%arg0: i32) -> (i32, i32) {
    %c0_i32 = arith.constant 0 : i32
    %c0_i32_0 = arith.constant 0 : i32
    return %arg0, %c0_i32 : i32, i32
  }
}

module attributes {stable_mosaic.version = 11 : i64} {
  func.func @_mlp_fused_kernel(%arg0: i32, %arg1: memref<8x128xbf16, #tpu.memory_space<vmem>>, %arg2: memref<128x128xbf16, #tpu.memory_space<vmem>>, %arg3: memref<1x128xf32, #tpu.memory_space<vmem>>, %arg4: memref<128x128xbf16, #tpu.memory_space<vmem>>, %arg5: memref<1x128xf32, #tpu.memory_space<vmem>>, %arg6: memref<128x128xbf16, #tpu.memory_space<vmem>>, %arg7: memref<8x128xf32, #tpu.memory_space<vmem>>) attributes {dimension_semantics = [#tpu.dimension_semantics<parallel>], iteration_bounds = array<i64: 1>, scalar_prefetch = 0 : i64, scratch_operands = 0 : i64, tpu.core_type = #tpu.core_type<tc>, window_params = [{transform_indices = @transform_0, window_bounds = array<i64: 8, 128>}, {pipeline_mode = #tpu.pipeline_mode<synchronous>, transform_indices = @transform_1, window_bounds = array<i64: 128, 128>}, {pipeline_mode = #tpu.pipeline_mode<synchronous>, transform_indices = @transform_2, window_bounds = array<i64: 1, 128>}, {pipeline_mode = #tpu.pipeline_mode<synchronous>, transform_indices = @transform_3, window_bounds = array<i64: 128, 128>}, {pipeline_mode = #tpu.pipeline_mode<synchronous>, transform_indices = @transform_4, window_bounds = array<i64: 1, 128>}, {pipeline_mode = #tpu.pipeline_mode<synchronous>, transform_indices = @transform_5, window_bounds = array<i64: 128, 128>}, {transform_indices = @transform_6, window_bounds = array<i64: 8, 128>}]} {
    %c0 = arith.constant 0 : index
    %c0_0 = arith.constant 0 : index
    %0 = vector.load %arg1[%c0, %c0_0] : memref<8x128xbf16, #tpu.memory_space<vmem>>, vector<8x128xbf16>
    %c0_1 = arith.constant 0 : index
    %c0_2 = arith.constant 0 : index
    %1 = vector.load %arg2[%c0_1, %c0_2] : memref<128x128xbf16, #tpu.memory_space<vmem>>, vector<128x128xbf16>
    %c0_3 = arith.constant 0 : index
    %c0_4 = arith.constant 0 : index
    %2 = vector.load %arg3[%c0_3, %c0_4] : memref<1x128xf32, #tpu.memory_space<vmem>>, vector<1x128xf32>
    %cst = arith.constant dense<0.000000e+00> : vector<8x128xf32>
    %3 = tpu.matmul %0, %1, %cst {dimension_numbers = #tpu.dot_dimension_numbers<[1], [0], [0], [1], [0, 0, 1, 1], [], []>} : vector<8x128xbf16>, vector<128x128xbf16>, vector<8x128xf32> -> vector<8x128xf32>
    %4 = vector.broadcast %2 : vector<1x128xf32> to vector<8x128xf32>
    %5 = arith.addf %3, %4 : vector<8x128xf32>
    %cst_5 = arith.constant 0.00999999977 : f32
    %cst_6 = arith.constant 0.000000e+00 : f32
    %6 = vector.broadcast %cst_6 : f32 to vector<8x128xf32>
    %7 = arith.cmpf oge, %5, %6 : vector<8x128xf32>
    %8 = vector.broadcast %cst_5 : f32 to vector<8x128xf32>
    %9 = arith.mulf %8, %5 : vector<8x128xf32>
    %10 = arith.select %7, %5, %9 : vector<8x128xi1>, vector<8x128xf32>
    %c0_7 = arith.constant 0 : index
    %c0_8 = arith.constant 0 : index
    %11 = vector.load %arg4[%c0_7, %c0_8] : memref<128x128xbf16, #tpu.memory_space<vmem>>, vector<128x128xbf16>
    %c0_9 = arith.constant 0 : index
    %c0_10 = arith.constant 0 : index
    %12 = vector.load %arg5[%c0_9, %c0_10] : memref<1x128xf32, #tpu.memory_space<vmem>>, vector<1x128xf32>
    %13 = arith.truncf %10 : vector<8x128xf32> to vector<8x128xbf16>
    %cst_11 = arith.constant dense<0.000000e+00> : vector<8x128xf32>
    %14 = tpu.matmul %13, %11, %cst_11 {dimension_numbers = #tpu.dot_dimension_numbers<[1], [0], [0], [1], [0, 0, 1, 1], [], []>} : vector<8x128xbf16>, vector<128x128xbf16>, vector<8x128xf32> -> vector<8x128xf32>
    %15 = vector.broadcast %12 : vector<1x128xf32> to vector<8x128xf32>
    %16 = arith.addf %14, %15 : vector<8x128xf32>
    %cst_12 = arith.constant 0.00999999977 : f32
    %cst_13 = arith.constant 0.000000e+00 : f32
    %17 = vector.broadcast %cst_13 : f32 to vector<8x128xf32>
    %18 = arith.cmpf oge, %16, %17 : vector<8x128xf32>
    %19 = vector.broadcast %cst_12 : f32 to vector<8x128xf32>
    %20 = arith.mulf %19, %16 : vector<8x128xf32>
    %21 = arith.select %18, %16, %20 : vector<8x128xi1>, vector<8x128xf32>
    %c0_14 = arith.constant 0 : index
    %c0_15 = arith.constant 0 : index
    %22 = vector.load %arg6[%c0_14, %c0_15] : memref<128x128xbf16, #tpu.memory_space<vmem>>, vector<128x128xbf16>
    %23 = arith.truncf %21 : vector<8x128xf32> to vector<8x128xbf16>
    %cst_16 = arith.constant dense<0.000000e+00> : vector<8x128xf32>
    %24 = tpu.matmul %23, %22, %cst_16 {dimension_numbers = #tpu.dot_dimension_numbers<[1], [0], [0], [1], [0, 0, 1, 1], [], []>} : vector<8x128xbf16>, vector<128x128xbf16>, vector<8x128xf32> -> vector<8x128xf32>
    %c0_17 = arith.constant 0 : index
    %c0_18 = arith.constant 0 : index
    %25 = vector.load %arg7[%c0_17, %c0_18] : memref<8x128xf32, #tpu.memory_space<vmem>>, vector<8x128xf32>
    tpu.vector_store %arg7[%c0_17, %c0_18], %24 {strides = array<i32>} : memref<8x128xf32, #tpu.memory_space<vmem>>, vector<8x128xf32>,
    return
  }
  func.func @transform_0(%arg0: i32) -> (i32, i32) {
    %c0_i32 = arith.constant 0 : i32
    %c0_i32_0 = arith.constant 0 : i32
    return %arg0, %c0_i32 : i32, i32
  }
  func.func @transform_1(%arg0: i32) -> (i32, i32) {
    %c0_i32 = arith.constant 0 : i32
    %c0_i32_0 = arith.constant 0 : i32
    %c0_i32_1 = arith.constant 0 : i32
    return %c0_i32, %c0_i32_0 : i32, i32
  }
  func.func @transform_2(%arg0: i32) -> (i32, i32) {
    %c0_i32 = arith.constant 0 : i32
    %c0_i32_0 = arith.constant 0 : i32
    %c0_i32_1 = arith.constant 0 : i32
    return %c0_i32, %c0_i32_0 : i32, i32
  }
  func.func @transform_3(%arg0: i32) -> (i32, i32) {
    %c0_i32 = arith.constant 0 : i32
    %c0_i32_0 = arith.constant 0 : i32
    %c0_i32_1 = arith.constant 0 : i32
    return %c0_i32, %c0_i32_0 : i32, i32
  }
  func.func @transform_4(%arg0: i32) -> (i32, i32) {
    %c0_i32 = arith.constant 0 : i32
    %c0_i32_0 = arith.constant 0 : i32
    %c0_i32_1 = arith.constant 0 : i32
    return %c0_i32, %c0_i32_0 : i32, i32
  }
  func.func @transform_5(%arg0: i32) -> (i32, i32) {
    %c0_i32 = arith.constant 0 : i32
    %c0_i32_0 = arith.constant 0 : i32
    %c0_i32_1 = arith.constant 0 : i32
    return %c0_i32, %c0_i32_0 : i32, i32
  }
  func.func @transform_6(%arg0: i32) -> (i32, i32) {
    %c0_i32 = arith.constant 0 : i32
    %c0_i32_0 = arith.constant 0 : i32
    return %arg0, %c0_i32 : i32, i32
  }
}

</mosaic_0001>

<llo_original>
// kernel: tpu_custom_call.1
$region0: #{tpu_custom_call.1}
  #allocation0 [shape = 'u32[]', space=smem, size = 0x4, offset = 0x4, fixed_abs, tag = 'smem constant byte address 0x4 - core index']
  #allocation1 [shape = 'u32[72,128]{1,0:T(1,128)}', space=vmem, size = 0x9000, scoped, tag = 'internal scratch']
  %s0 = inlined_call_operand.hbm [shape: bf16[8,128], index: 0, kind: input, shape index: {}]
  %s1 = inlined_call_operand.hbm [shape: bf16[128,128], index: 1, kind: input, shape index: {}]
  %s2 = inlined_call_operand.vmem [shape: f32[1,128], index: 2, kind: input, shape index: {}]
  %s3 = inlined_call_operand.hbm [shape: bf16[128,128], index: 3, kind: input, shape index: {}]
  %s4 = inlined_call_operand.vmem [shape: f32[1,128], index: 4, kind: input, shape index: {}]
  %s5 = inlined_call_operand.hbm [shape: bf16[128,128], index: 5, kind: input, shape index: {}]
  %s6 = inlined_call_operand.hbm [shape: f32[8,128], index: 6, kind: output, shape index: {}]
  %s7 = sld [smem:[#allocation0]]
  $region50: #{tpu_custom_call.1} parent=0
    _
  %s9 = ssub.s32 1, %s7
  %s10 = scalar_select 0, %s9, %s7
  $region1: #{tpu_custom_call.1} parent=0
    #allocation2 [shape = 'u8[2048]{0}', space=vmem, size = 0x800, scoped, tag = 'input window, operand 0, single buffered']
    #allocation3 [shape = 's32[1]{0}', space=sflag, size = 0x4, scoped, tag = 'scoped memory for tpu_custom_call.1']
    #allocation4 [shape = 's32[1]{0}', space=sflag, size = 0x4, scoped, tag = 'scoped memory for tpu_custom_call.1']
    #allocation5 [shape = 'u8[32768]{0}', space=vmem, size = 0x8000, scoped, tag = 'input window, operand 1, single buffered']
    #allocation6 [shape = 's32[1]{0}', space=sflag, size = 0x4, scoped, tag = 'scoped memory for tpu_custom_call.1']
    #allocation7 [shape = 'u8[32768]{0}', space=vmem, size = 0x8000, scoped, tag = 'input window, operand 3, single buffered']
    #allocation8 [shape = 'u8[32768]{0}', space=vmem, size = 0x8000, scoped, tag = 'input window, operand 5, single buffered']
    #allocation9 [shape = 's32[1]{0}', space=sflag, size = 0x4, scoped, tag = 'scoped memory for tpu_custom_call.1']
    #allocation10 [shape = 'u8[4096]{0}', space=vmem, size = 0x1000, scoped, tag = 'output window, operand 0, single buffered']
    %11 = vsyncpa [#allocation3], 0
    %12 = vsyncpa [#allocation6], 0
    %13 = vsyncpa [#allocation9], 0
    %14 = vsyncpa [#allocation4], 0
    // Predicated region
    $region2: #{tpu_custom_call.1} parent=1 // pred_check
      _
    $region3: #{tpu_custom_call.1} parent=1 // pred_check_branch
      %16 = sbr.rel (0) target = $region5
    $region4: #{tpu_custom_call.1} parent=1 // pred_region
      %18 = vsyncadd [#allocation3], 0
      %s20 = sshll.u32 %s0, 4
      %s21 = int_to_ptr.hbm [resolvable:$true] %s20
      %s22 = sshll.u32 [#allocation2], 4
      %s23 = int_to_ptr.vmem [resolvable:$true] %s22
      %25 = dma.hbm_to_vmem [thread:$0]  %s21, 64, %s23, [#allocation3]
    $region5: #{tpu_custom_call.1} parent=1 // pred_fallthru
      _
    // Predicated region
    $region6: #{tpu_custom_call.1} parent=1 // pred_check
      _
    $region7: #{tpu_custom_call.1} parent=1 // pred_check_branch
      %27 = sbr.rel (0) target = $region9
    $region8: #{tpu_custom_call.1} parent=1 // pred_region
      %29 = vsyncadd [#allocation6], 0
      %s30 = sshll.u32 %s1, 4
      %s31 = int_to_ptr.hbm [resolvable:$true] %s30
      %s32 = sshll.u32 [#allocation5], 4
      %s33 = int_to_ptr.vmem [resolvable:$true] %s32
      %38 = dma.hbm_to_vmem [thread:$0]  %s31, 1024, %s33, [#allocation6], 64, 64, 4
    $region9: #{tpu_custom_call.1} parent=1 // pred_fallthru
      _
    // Predicated region
    $region10: #{tpu_custom_call.1} parent=1 // pred_check
      _
    $region11: #{tpu_custom_call.1} parent=1 // pred_check_branch
      %40 = sbr.rel (0) target = $region13
    $region12: #{tpu_custom_call.1} parent=1 // pred_region
      _
    $region13: #{tpu_custom_call.1} parent=1 // pred_fallthru
      _
    // Predicated region
    $region14: #{tpu_custom_call.1} parent=1 // pred_check
      _
    $region15: #{tpu_custom_call.1} parent=1 // pred_check_branch
      %42 = sbr.rel (0) target = $region17
    $region16: #{tpu_custom_call.1} parent=1 // pred_region
      %44 = vsyncadd [#allocation6], 0
      %s45 = sshll.u32 %s3, 4
      %s46 = int_to_ptr.hbm [resolvable:$true] %s45
      %s47 = sshll.u32 [#allocation7], 4
      %s48 = int_to_ptr.vmem [resolvable:$true] %s47
      %53 = dma.hbm_to_vmem [thread:$0]  %s46, 1024, %s48, [#allocation6], 64, 64, 4
    $region17: #{tpu_custom_call.1} parent=1 // pred_fallthru
      _
    // Predicated region
    $region18: #{tpu_custom_call.1} parent=1 // pred_check
      _
    $region19: #{tpu_custom_call.1} parent=1 // pred_check_branch
      %55 = sbr.rel (0) target = $region21
    $region20: #{tpu_custom_call.1} parent=1 // pred_region
      _
    $region21: #{tpu_custom_call.1} parent=1 // pred_fallthru
      _
    // Predicated region
    $region22: #{tpu_custom_call.1} parent=1 // pred_check
      _
    $region23: #{tpu_custom_call.1} parent=1 // pred_check_branch
      %57 = sbr.rel (0) target = $region25
    $region24: #{tpu_custom_call.1} parent=1 // pred_region
      %59 = vsyncadd [#allocation9], 0
      %s60 = sshll.u32 %s5, 4
      %s61 = int_to_ptr.hbm [resolvable:$true] %s60
      %s62 = sshll.u32 [#allocation8], 4
      %s63 = int_to_ptr.vmem [resolvable:$true] %s62
      %68 = dma.hbm_to_vmem [thread:$0]  %s61, 1024, %s63, [#allocation9], 64, 64, 4
    $region25: #{tpu_custom_call.1} parent=1 // pred_fallthru
      _
    // Predicated region
    $region26: #{tpu_custom_call.1} parent=1 // pred_check
      _
    $region27: #{tpu_custom_call.1} parent=1 // pred_check_branch
      %70 = sbr.rel (0) target = $region29
    $region28: #{tpu_custom_call.1} parent=1 // pred_region
      %72 = dma.done [#allocation3], 64
    $region29: #{tpu_custom_call.1} parent=1 // pred_fallthru
      _
    // Predicated region
    $region30: #{tpu_custom_call.1} parent=1 // pred_check
      _
    $region31: #{tpu_custom_call.1} parent=1 // pred_check_branch
      %74 = sbr.rel (0) target = $region33
    $region32: #{tpu_custom_call.1} parent=1 // pred_region
      %76 = dma.done [#allocation6], 1024
    $region33: #{tpu_custom_call.1} parent=1 // pred_fallthru
      _
    // Predicated region
    $region34: #{tpu_custom_call.1} parent=1 // pred_check
      _
    $region35: #{tpu_custom_call.1} parent=1 // pred_check_branch
      %78 = sbr.rel (0) target = $region37
    $region36: #{tpu_custom_call.1} parent=1 // pred_region
      %80 = dma.done [#allocation6], 1024
    $region37: #{tpu_custom_call.1} parent=1 // pred_fallthru
      _
    // Predicated region
    $region38: #{tpu_custom_call.1} parent=1 // pred_check
      _
    $region39: #{tpu_custom_call.1} parent=1 // pred_check_branch
      %82 = sbr.rel (0) target = $region41
    $region40: #{tpu_custom_call.1} parent=1 // pred_region
      %84 = dma.done [#allocation9], 1024
    $region41: #{tpu_custom_call.1} parent=1 // pred_fallthru
      _
    %v85 = vld [vmem:[#allocation2] sm:$0xf]
    %v86 = vld [vmem:[#allocation5] sm:$0xf]
    %v87 = vld [vmem:[#allocation5 + $0x4] sm:$0xf]
    %v88 = vld [vmem:[#allocation5 + $0x8] sm:$0xf]
    %v89 = vld [vmem:[#allocation5 + $0xc] sm:$0xf]
    %v90 = vld [vmem:[#allocation5 + $0x10] sm:$0xf]
    %v91 = vld [vmem:[#allocation5 + $0x14] sm:$0xf]
    %v92 = vld [vmem:[#allocation5 + $0x18] sm:$0xf]
    %v93 = vld [vmem:[#allocation5 + $0x1c] sm:$0xf]
    %v94 = vld [vmem:[#allocation5 + $0x20] sm:$0xf]
    %v95 = vld [vmem:[#allocation5 + $0x24] sm:$0xf]
    %v96 = vld [vmem:[#allocation5 + $0x28] sm:$0xf]
    %v97 = vld [vmem:[#allocation5 + $0x2c] sm:$0xf]
    %v98 = vld [vmem:[#allocation5 + $0x30] sm:$0xf]
    %v99 = vld [vmem:[#allocation5 + $0x34] sm:$0xf]
    %v100 = vld [vmem:[#allocation5 + $0x38] sm:$0xf]
    %v101 = vld [vmem:[#allocation5 + $0x3c] sm:$0xf]
    %v102 = vld [vmem:[%s2] sm:$0x1]
    %v104 = vperm.slane %v102, 0
    %v122 = vunpack.c.l.b16 %v86
    %v123 = vunpack.c.l.b16 %v87
    %v124 = vunpack.c.l.b16 %v88
    %v125 = vunpack.c.l.b16 %v89
    %v126 = vunpack.c.l.b16 %v90
    %v127 = vunpack.c.l.b16 %v91
    %v128 = vunpack.c.l.b16 %v92
    %v129 = vunpack.c.l.b16 %v93
    %v130 = vunpack.c.l.b16 %v94
    %v131 = vunpack.c.l.b16 %v95
    %v132 = vunpack.c.l.b16 %v96
    %v133 = vunpack.c.l.b16 %v97
    %v134 = vunpack.c.l.b16 %v98
    %v135 = vunpack.c.l.b16 %v99
    %v136 = vunpack.c.l.b16 %v100
    %v137 = vunpack.c.l.b16 %v101
    %v138 = vpack.c.b16 %v123, %v122
    %v139 = vpack.c.b16 %v125, %v124
    %v140 = vpack.c.b16 %v127, %v126
    %v141 = vpack.c.b16 %v129, %v128
    %v142 = vpack.c.b16 %v131, %v130
    %v143 = vpack.c.b16 %v133, %v132
    %v144 = vpack.c.b16 %v135, %v134
    %v145 = vpack.c.b16 %v137, %v136
    %154 = vmatpush.bf16.msra.mxu0 %v145
    %155 = vmatpush.bf16.msra.mxu0 %v144
    %156 = vmatpush.bf16.msra.mxu0 %v143
    %157 = vmatpush.bf16.msra.mxu0 %v142
    %158 = vmatpush.bf16.msra.mxu0 %v141
    %159 = vmatpush.bf16.msra.mxu0 %v140
    %160 = vmatpush.bf16.msra.mxu0 %v139
    %161 = vmatpush.bf16.msra.mxu0 %v138
    %162 = vmatmul.bf16.gmra.mxu0 %v85
    %v163 = vpop.f32.mrf.mxu0
    %v164 = vadd.f32 %v104, %v163
    %v165 = vpop.f32.mrf.mxu0
    %166 = vdwg.mxu0
    %vm167 = vcmp.ge.f32.partialorder %v164, 0.0
    %v168 = vmul.f32 %v164, 0.01
    %v169 = vsel %vm167, %v164, %v168
    %v170 = vld [vmem:[#allocation7] sm:$0xf]
    %v171 = vld [vmem:[#allocation7 + $0x4] sm:$0xf]
    %v172 = vld [vmem:[#allocation7 + $0x8] sm:$0xf]
    %v173 = vld [vmem:[#allocation7 + $0xc] sm:$0xf]
    %v174 = vld [vmem:[#allocation7 + $0x10] sm:$0xf]
    %v175 = vld [vmem:[#allocation7 + $0x14] sm:$0xf]
    %v176 = vld [vmem:[#allocation7 + $0x18] sm:$0xf]
    %v177 = vld [vmem:[#allocation7 + $0x1c] sm:$0xf]
    %v178 = vld [vmem:[#allocation7 + $0x20] sm:$0xf]
    %v179 = vld [vmem:[#allocation7 + $0x24] sm:$0xf]
    %v180 = vld [vmem:[#allocation7 + $0x28] sm:$0xf]
    %v181 = vld [vmem:[#allocation7 + $0x2c] sm:$0xf]
    %v182 = vld [vmem:[#allocation7 + $0x30] sm:$0xf]
    %v183 = vld [vmem:[#allocation7 + $0x34] sm:$0xf]
    %v184 = vld [vmem:[#allocation7 + $0x38] sm:$0xf]
    %v185 = vld [vmem:[#allocation7 + $0x3c] sm:$0xf]
    %v186 = vld [vmem:[%s4] sm:$0x1]
    %v187 = vpack.c.bf16 %v169, %v169
    %v189 = vperm.slane %v186, 0
    %v207 = vunpack.c.l.b16 %v170
    %v208 = vunpack.c.l.b16 %v171
    %v209 = vunpack.c.l.b16 %v172
    %v210 = vunpack.c.l.b16 %v173
    %v211 = vunpack.c.l.b16 %v174
    %v212 = vunpack.c.l.b16 %v175
    %v213 = vunpack.c.l.b16 %v176
    %v214 = vunpack.c.l.b16 %v177
    %v215 = vunpack.c.l.b16 %v178
    %v216 = vunpack.c.l.b16 %v179
    %v217 = vunpack.c.l.b16 %v180
    %v218 = vunpack.c.l.b16 %v181
    %v219 = vunpack.c.l.b16 %v182
    %v220 = vunpack.c.l.b16 %v183
    %v221 = vunpack.c.l.b16 %v184
    %v222 = vunpack.c.l.b16 %v185
    %v223 = vpack.c.b16 %v208, %v207
    %v224 = vpack.c.b16 %v210, %v209
    %v225 = vpack.c.b16 %v212, %v211
    %v226 = vpack.c.b16 %v214, %v213
    %v227 = vpack.c.b16 %v216, %v215
    %v228 = vpack.c.b16 %v218, %v217
    %v229 = vpack.c.b16 %v220, %v219
    %v230 = vpack.c.b16 %v222, %v221
    %239 = vmatpush.bf16.msra.mxu0 %v230
    %240 = vmatpush.bf16.msra.mxu0 %v229
    %241 = vmatpush.bf16.msra.mxu0 %v228
    %242 = vmatpush.bf16.msra.mxu0 %v227
    %243 = vmatpush.bf16.msra.mxu0 %v226
    %244 = vmatpush.bf16.msra.mxu0 %v225
    %245 = vmatpush.bf16.msra.mxu0 %v224
    %246 = vmatpush.bf16.msra.mxu0 %v223
    %247 = vmatmul.bf16.gmra.mxu0 %v187
    %v248 = vpop.f32.mrf.mxu0
    %v249 = vadd.f32 %v189, %v248
    %v250 = vpop.f32.mrf.mxu0
    %251 = vdwg.mxu0
    %vm252 = vcmp.ge.f32.partialorder %v249, 0.0
    %v253 = vmul.f32 %v249, 0.01
    %v254 = vsel %vm252, %v249, %v253
    %v255 = vld [vmem:[#allocation8] sm:$0xf]
    %v256 = vld [vmem:[#allocation8 + $0x4] sm:$0xf]
    %v257 = vld [vmem:[#allocation8 + $0x8] sm:$0xf]
    %v258 = vld [vmem:[#allocation8 + $0xc] sm:$0xf]
    %v259 = vld [vmem:[#allocation8 + $0x10] sm:$0xf]
    %v260 = vld [vmem:[#allocation8 + $0x14] sm:$0xf]
    %v261 = vld [vmem:[#allocation8 + $0x18] sm:$0xf]
    %v262 = vld [vmem:[#allocation8 + $0x1c] sm:$0xf]
    %v263 = vld [vmem:[#allocation8 + $0x20] sm:$0xf]
    %v264 = vld [vmem:[#allocation8 + $0x24] sm:$0xf]
    %v265 = vld [vmem:[#allocation8 + $0x28] sm:$0xf]
    %v266 = vld [vmem:[#allocation8 + $0x2c] sm:$0xf]
    %v267 = vld [vmem:[#allocation8 + $0x30] sm:$0xf]
    %v268 = vld [vmem:[#allocation8 + $0x34] sm:$0xf]
    %v269 = vld [vmem:[#allocation8 + $0x38] sm:$0xf]
    %v270 = vld [vmem:[#allocation8 + $0x3c] sm:$0xf]
    %v271 = vpack.c.bf16 %v254, %v254
    %v288 = vunpack.c.l.b16 %v255
    %v289 = vunpack.c.l.b16 %v256
    %v290 = vunpack.c.l.b16 %v257
    %v291 = vunpack.c.l.b16 %v258
    %v292 = vunpack.c.l.b16 %v259
    %v293 = vunpack.c.l.b16 %v260
    %v294 = vunpack.c.l.b16 %v261
    %v295 = vunpack.c.l.b16 %v262
    %v296 = vunpack.c.l.b16 %v263
    %v297 = vunpack.c.l.b16 %v264
    %v298 = vunpack.c.l.b16 %v265
    %v299 = vunpack.c.l.b16 %v266
    %v300 = vunpack.c.l.b16 %v267
    %v301 = vunpack.c.l.b16 %v268
    %v302 = vunpack.c.l.b16 %v269
    %v303 = vunpack.c.l.b16 %v270
    %v304 = vpack.c.b16 %v289, %v288
    %v305 = vpack.c.b16 %v291, %v290
    %v306 = vpack.c.b16 %v293, %v292
    %v307 = vpack.c.b16 %v295, %v294
    %v308 = vpack.c.b16 %v297, %v296
    %v309 = vpack.c.b16 %v299, %v298
    %v310 = vpack.c.b16 %v301, %v300
    %v311 = vpack.c.b16 %v303, %v302
    %320 = vmatpush.bf16.msra.mxu0 %v311
    %321 = vmatpush.bf16.msra.mxu0 %v310
    %322 = vmatpush.bf16.msra.mxu0 %v309
    %323 = vmatpush.bf16.msra.mxu0 %v308
    %324 = vmatpush.bf16.msra.mxu0 %v307
    %325 = vmatpush.bf16.msra.mxu0 %v306
    %326 = vmatpush.bf16.msra.mxu0 %v305
    %327 = vmatpush.bf16.msra.mxu0 %v304
    %328 = vmatmul.bf16.gmra.mxu0 %v271
    %v329 = vpop.f32.mrf.mxu0
    %v330 = vadd.f32 0.0, %v329
    %v331 = vpop.f32.mrf.mxu0
    %332 = vdwg.mxu0
    %333 = vst [vmem:[#allocation10] sm:$0xff] %v330
    // Predicated region
    $region42: #{tpu_custom_call.1} parent=1 // pred_check
      _
    $region43: #{tpu_custom_call.1} parent=1 // pred_check_branch
      %335 = sbr.rel (0) target = $region45
    $region44: #{tpu_custom_call.1} parent=1 // pred_region
      %337 = vsyncadd [#allocation4], 0
      %s339 = sshll.u32 [#allocation10], 4
      %s340 = int_to_ptr.vmem [resolvable:$true] %s339
      %s341 = sshll.u32 %s6, 4
      %s342 = int_to_ptr.hbm [resolvable:$true] %s341
      %344 = dma.vmem_to_hbm [thread:$0]  %s340, 128, %s342, [#allocation4]
    $region45: #{tpu_custom_call.1} parent=1 // pred_fallthru
      _
    // Predicated region
    $region46: #{tpu_custom_call.1} parent=1 // pred_check
      _
    $region47: #{tpu_custom_call.1} parent=1 // pred_check_branch
      %346 = sbr.rel (0) target = $region49
    $region48: #{tpu_custom_call.1} parent=1 // pred_region
      %348 = dma.done [#allocation4], 128
    $region49: #{tpu_custom_call.1} parent=1 // pred_fallthru
      _
    %349 = vsyncpa [#allocation3], 1
    %350 = vsyncpa [#allocation6], 1
    %351 = vsyncpa [#allocation9], 1
    %352 = vsyncpa [#allocation4], 1

// kernel: tpu_custom_call.1
$region0: #{tpu_custom_call.1}
  #allocation0 [shape = 'u32[]', space=smem, size = 0x4, offset = 0x4, fixed_abs, tag = 'smem constant byte address 0x4 - core index']
  #allocation1 [shape = 'u32[72,128]{1,0:T(1,128)}', space=vmem, size = 0x9000, scoped, tag = 'internal scratch']
  %s0 = inlined_call_operand.hbm [shape: bf16[8,128], index: 0, kind: input, shape index: {}]
  %s1 = inlined_call_operand.hbm [shape: bf16[128,128], index: 1, kind: input, shape index: {}]
  %s2 = inlined_call_operand.vmem [shape: f32[1,128], index: 2, kind: input, shape index: {}]
  %s3 = inlined_call_operand.hbm [shape: bf16[128,128], index: 3, kind: input, shape index: {}]
  %s4 = inlined_call_operand.vmem [shape: f32[1,128], index: 4, kind: input, shape index: {}]
  %s5 = inlined_call_operand.hbm [shape: bf16[128,128], index: 5, kind: input, shape index: {}]
  %s6 = inlined_call_operand.hbm [shape: f32[8,128], index: 6, kind: output, shape index: {}]
  %s7 = sld [smem:[#allocation0]]
  $region50: #{tpu_custom_call.1} parent=0
    _
  %s9 = ssub.s32 1, %s7
  %s10 = scalar_select 0, %s9, %s7
  $region1: #{tpu_custom_call.1} parent=0
    #allocation2 [shape = 'u8[2048]{0}', space=vmem, size = 0x800, scoped, tag = 'input window, operand 0, single buffered']
    #allocation3 [shape = 's32[1]{0}', space=sflag, size = 0x4, scoped, tag = 'scoped memory for tpu_custom_call.1']
    #allocation4 [shape = 's32[1]{0}', space=sflag, size = 0x4, scoped, tag = 'scoped memory for tpu_custom_call.1']
    #allocation5 [shape = 'u8[32768]{0}', space=vmem, size = 0x8000, scoped, tag = 'input window, operand 1, single buffered']
    #allocation6 [shape = 's32[1]{0}', space=sflag, size = 0x4, scoped, tag = 'scoped memory for tpu_custom_call.1']
    #allocation7 [shape = 'u8[32768]{0}', space=vmem, size = 0x8000, scoped, tag = 'input window, operand 3, single buffered']
    #allocation8 [shape = 'u8[32768]{0}', space=vmem, size = 0x8000, scoped, tag = 'input window, operand 5, single buffered']
    #allocation9 [shape = 's32[1]{0}', space=sflag, size = 0x4, scoped, tag = 'scoped memory for tpu_custom_call.1']
    #allocation10 [shape = 'u8[4096]{0}', space=vmem, size = 0x1000, scoped, tag = 'output window, operand 0, single buffered']
    %11 = vsyncpa [#allocation3], 0
    %12 = vsyncpa [#allocation6], 0
    %13 = vsyncpa [#allocation9], 0
    %14 = vsyncpa [#allocation4], 0
    // Predicated region
    $region2: #{tpu_custom_call.1} parent=1 // pred_check
      _
    $region3: #{tpu_custom_call.1} parent=1 // pred_check_branch
      %16 = sbr.rel (0) target = $region5
    $region4: #{tpu_custom_call.1} parent=1 // pred_region
      %18 = vsyncadd [#allocation3], 0
      %s20 = sshll.u32 %s0, 4
      %s21 = int_to_ptr.hbm [resolvable:$true] %s20
      %s22 = sshll.u32 [#allocation2], 4
      %s23 = int_to_ptr.vmem [resolvable:$true] %s22
      %25 = dma.hbm_to_vmem [thread:$0]  %s21, 64, %s23, [#allocation3]
    $region5: #{tpu_custom_call.1} parent=1 // pred_fallthru
      _
    // Predicated region
    $region6: #{tpu_custom_call.1} parent=1 // pred_check
      _
    $region7: #{tpu_custom_call.1} parent=1 // pred_check_branch
      %27 = sbr.rel (0) target = $region9
    $region8: #{tpu_custom_call.1} parent=1 // pred_region
      %29 = vsyncadd [#allocation6], 0
      %s30 = sshll.u32 %s1, 4
      %s31 = int_to_ptr.hbm [resolvable:$true] %s30
      %s32 = sshll.u32 [#allocation5], 4
      %s33 = int_to_ptr.vmem [resolvable:$true] %s32
      %38 = dma.hbm_to_vmem [thread:$0]  %s31, 1024, %s33, [#allocation6], 64, 64, 4
    $region9: #{tpu_custom_call.1} parent=1 // pred_fallthru
      _
    // Predicated region
    $region10: #{tpu_custom_call.1} parent=1 // pred_check
      _
    $region11: #{tpu_custom_call.1} parent=1 // pred_check_branch
      %40 = sbr.rel (0) target = $region13
    $region12: #{tpu_custom_call.1} parent=1 // pred_region
      _
    $region13: #{tpu_custom_call.1} parent=1 // pred_fallthru
      _
    // Predicated region
    $region14: #{tpu_custom_call.1} parent=1 // pred_check
      _
    $region15: #{tpu_custom_call.1} parent=1 // pred_check_branch
      %42 = sbr.rel (0) target = $region17
    $region16: #{tpu_custom_call.1} parent=1 // pred_region
      %44 = vsyncadd [#allocation6], 0
      %s45 = sshll.u32 %s3, 4
      %s46 = int_to_ptr.hbm [resolvable:$true] %s45
      %s47 = sshll.u32 [#allocation7], 4
      %s48 = int_to_ptr.vmem [resolvable:$true] %s47
      %53 = dma.hbm_to_vmem [thread:$0]  %s46, 1024, %s48, [#allocation6], 64, 64, 4
    $region17: #{tpu_custom_call.1} parent=1 // pred_fallthru
      _
    // Predicated region
    $region18: #{tpu_custom_call.1} parent=1 // pred_check
      _
    $region19: #{tpu_custom_call.1} parent=1 // pred_check_branch
      %55 = sbr.rel (0) target = $region21
    $region20: #{tpu_custom_call.1} parent=1 // pred_region
      _
    $region21: #{tpu_custom_call.1} parent=1 // pred_fallthru
      _
    // Predicated region
    $region22: #{tpu_custom_call.1} parent=1 // pred_check
      _
    $region23: #{tpu_custom_call.1} parent=1 // pred_check_branch
      %57 = sbr.rel (0) target = $region25
    $region24: #{tpu_custom_call.1} parent=1 // pred_region
      %59 = vsyncadd [#allocation9], 0
      %s60 = sshll.u32 %s5, 4
      %s61 = int_to_ptr.hbm [resolvable:$true] %s60
      %s62 = sshll.u32 [#allocation8], 4
      %s63 = int_to_ptr.vmem [resolvable:$true] %s62
      %68 = dma.hbm_to_vmem [thread:$0]  %s61, 1024, %s63, [#allocation9], 64, 64, 4
    $region25: #{tpu_custom_call.1} parent=1 // pred_fallthru
      _
    // Predicated region
    $region26: #{tpu_custom_call.1} parent=1 // pred_check
      _
    $region27: #{tpu_custom_call.1} parent=1 // pred_check_branch
      %70 = sbr.rel (0) target = $region29
    $region28: #{tpu_custom_call.1} parent=1 // pred_region
      %72 = dma.done [#allocation3], 64
    $region29: #{tpu_custom_call.1} parent=1 // pred_fallthru
      _
    // Predicated region
    $region30: #{tpu_custom_call.1} parent=1 // pred_check
      _
    $region31: #{tpu_custom_call.1} parent=1 // pred_check_branch
      %74 = sbr.rel (0) target = $region33
    $region32: #{tpu_custom_call.1} parent=1 // pred_region
      %76 = dma.done [#allocation6], 1024
    $region33: #{tpu_custom_call.1} parent=1 // pred_fallthru
      _
    // Predicated region
    $region34: #{tpu_custom_call.1} parent=1 // pred_check
      _
    $region35: #{tpu_custom_call.1} parent=1 // pred_check_branch
      %78 = sbr.rel (0) target = $region37
    $region36: #{tpu_custom_call.1} parent=1 // pred_region
      %80 = dma.done [#allocation6], 1024
    $region37: #{tpu_custom_call.1} parent=1 // pred_fallthru
      _
    // Predicated region
    $region38: #{tpu_custom_call.1} parent=1 // pred_check
      _
    $region39: #{tpu_custom_call.1} parent=1 // pred_check_branch
      %82 = sbr.rel (0) target = $region41
    $region40: #{tpu_custom_call.1} parent=1 // pred_region
      %84 = dma.done [#allocation9], 1024
    $region41: #{tpu_custom_call.1} parent=1 // pred_fallthru
      _
    %v85 = vld [vmem:[#allocation2] sm:$0xf]
    %v86 = vld [vmem:[#allocation5] sm:$0xf]
    %v87 = vld [vmem:[#allocation5 + $0x4] sm:$0xf]
    %v88 = vld [vmem:[#allocation5 + $0x8] sm:$0xf]
    %v89 = vld [vmem:[#allocation5 + $0xc] sm:$0xf]
    %v90 = vld [vmem:[#allocation5 + $0x10] sm:$0xf]
    %v91 = vld [vmem:[#allocation5 + $0x14] sm:$0xf]
    %v92 = vld [vmem:[#allocation5 + $0x18] sm:$0xf]
    %v93 = vld [vmem:[#allocation5 + $0x1c] sm:$0xf]
    %v94 = vld [vmem:[#allocation5 + $0x20] sm:$0xf]
    %v95 = vld [vmem:[#allocation5 + $0x24] sm:$0xf]
    %v96 = vld [vmem:[#allocation5 + $0x28] sm:$0xf]
    %v97 = vld [vmem:[#allocation5 + $0x2c] sm:$0xf]
    %v98 = vld [vmem:[#allocation5 + $0x30] sm:$0xf]
    %v99 = vld [vmem:[#allocation5 + $0x34] sm:$0xf]
    %v100 = vld [vmem:[#allocation5 + $0x38] sm:$0xf]
    %v101 = vld [vmem:[#allocation5 + $0x3c] sm:$0xf]
    %v102 = vld [vmem:[%s2] sm:$0x1]
    %v104 = vperm.slane %v102, 0
    %v122 = vunpack.c.l.b16 %v86
    %v123 = vunpack.c.l.b16 %v87
    %v124 = vunpack.c.l.b16 %v88
    %v125 = vunpack.c.l.b16 %v89
    %v126 = vunpack.c.l.b16 %v90
    %v127 = vunpack.c.l.b16 %v91
    %v128 = vunpack.c.l.b16 %v92
    %v129 = vunpack.c.l.b16 %v93
    %v130 = vunpack.c.l.b16 %v94
    %v131 = vunpack.c.l.b16 %v95
    %v132 = vunpack.c.l.b16 %v96
    %v133 = vunpack.c.l.b16 %v97
    %v134 = vunpack.c.l.b16 %v98
    %v135 = vunpack.c.l.b16 %v99
    %v136 = vunpack.c.l.b16 %v100
    %v137 = vunpack.c.l.b16 %v101
    %v138 = vpack.c.b16 %v123, %v122
    %v139 = vpack.c.b16 %v125, %v124
    %v140 = vpack.c.b16 %v127, %v126
    %v141 = vpack.c.b16 %v129, %v128
    %v142 = vpack.c.b16 %v131, %v130
    %v143 = vpack.c.b16 %v133, %v132
    %v144 = vpack.c.b16 %v135, %v134
    %v145 = vpack.c.b16 %v137, %v136
    %154 = vmatpush.bf16.msra.mxu0 %v145
    %155 = vmatpush.bf16.msra.mxu0 %v144
    %156 = vmatpush.bf16.msra.mxu0 %v143
    %157 = vmatpush.bf16.msra.mxu0 %v142
    %158 = vmatpush.bf16.msra.mxu0 %v141
    %159 = vmatpush.bf16.msra.mxu0 %v140
    %160 = vmatpush.bf16.msra.mxu0 %v139
    %161 = vmatpush.bf16.msra.mxu0 %v138
    %162 = vmatmul.bf16.gmra.mxu0 %v85
    %v163 = vpop.f32.mrf.mxu0
    %v164 = vadd.f32 %v104, %v163
    %v165 = vpop.f32.mrf.mxu0
    %166 = vdwg.mxu0
    %vm167 = vcmp.ge.f32.partialorder %v164, 0.0
    %v168 = vmul.f32 %v164, 0.01
    %v169 = vsel %vm167, %v164, %v168
    %v170 = vld [vmem:[#allocation7] sm:$0xf]
    %v171 = vld [vmem:[#allocation7 + $0x4] sm:$0xf]
    %v172 = vld [vmem:[#allocation7 + $0x8] sm:$0xf]
    %v173 = vld [vmem:[#allocation7 + $0xc] sm:$0xf]
    %v174 = vld [vmem:[#allocation7 + $0x10] sm:$0xf]
    %v175 = vld [vmem:[#allocation7 + $0x14] sm:$0xf]
    %v176 = vld [vmem:[#allocation7 + $0x18] sm:$0xf]
    %v177 = vld [vmem:[#allocation7 + $0x1c] sm:$0xf]
    %v178 = vld [vmem:[#allocation7 + $0x20] sm:$0xf]
    %v179 = vld [vmem:[#allocation7 + $0x24] sm:$0xf]
    %v180 = vld [vmem:[#allocation7 + $0x28] sm:$0xf]
    %v181 = vld [vmem:[#allocation7 + $0x2c] sm:$0xf]
    %v182 = vld [vmem:[#allocation7 + $0x30] sm:$0xf]
    %v183 = vld [vmem:[#allocation7 + $0x34] sm:$0xf]
    %v184 = vld [vmem:[#allocation7 + $0x38] sm:$0xf]
    %v185 = vld [vmem:[#allocation7 + $0x3c] sm:$0xf]
    %v186 = vld [vmem:[%s4] sm:$0x1]
    %v187 = vpack.c.bf16 %v169, %v169
    %v189 = vperm.slane %v186, 0
    %v207 = vunpack.c.l.b16 %v170
    %v208 = vunpack.c.l.b16 %v171
    %v209 = vunpack.c.l.b16 %v172
    %v210 = vunpack.c.l.b16 %v173
    %v211 = vunpack.c.l.b16 %v174
    %v212 = vunpack.c.l.b16 %v175
    %v213 = vunpack.c.l.b16 %v176
    %v214 = vunpack.c.l.b16 %v177
    %v215 = vunpack.c.l.b16 %v178
    %v216 = vunpack.c.l.b16 %v179
    %v217 = vunpack.c.l.b16 %v180
    %v218 = vunpack.c.l.b16 %v181
    %v219 = vunpack.c.l.b16 %v182
    %v220 = vunpack.c.l.b16 %v183
    %v221 = vunpack.c.l.b16 %v184
    %v222 = vunpack.c.l.b16 %v185
    %v223 = vpack.c.b16 %v208, %v207
    %v224 = vpack.c.b16 %v210, %v209
    %v225 = vpack.c.b16 %v212, %v211
    %v226 = vpack.c.b16 %v214, %v213
    %v227 = vpack.c.b16 %v216, %v215
    %v228 = vpack.c.b16 %v218, %v217
    %v229 = vpack.c.b16 %v220, %v219
    %v230 = vpack.c.b16 %v222, %v221
    %239 = vmatpush.bf16.msra.mxu0 %v230
    %240 = vmatpush.bf16.msra.mxu0 %v229
    %241 = vmatpush.bf16.msra.mxu0 %v228
    %242 = vmatpush.bf16.msra.mxu0 %v227
    %243 = vmatpush.bf16.msra.mxu0 %v226
    %244 = vmatpush.bf16.msra.mxu0 %v225
    %245 = vmatpush.bf16.msra.mxu0 %v224
    %246 = vmatpush.bf16.msra.mxu0 %v223
    %247 = vmatmul.bf16.gmra.mxu0 %v187
    %v248 = vpop.f32.mrf.mxu0
    %v249 = vadd.f32 %v189, %v248
    %v250 = vpop.f32.mrf.mxu0
    %251 = vdwg.mxu0
    %vm252 = vcmp.ge.f32.partialorder %v249, 0.0
    %v253 = vmul.f32 %v249, 0.01
    %v254 = vsel %vm252, %v249, %v253
    %v255 = vld [vmem:[#allocation8] sm:$0xf]
    %v256 = vld [vmem:[#allocation8 + $0x4] sm:$0xf]
    %v257 = vld [vmem:[#allocation8 + $0x8] sm:$0xf]
    %v258 = vld [vmem:[#allocation8 + $0xc] sm:$0xf]
    %v259 = vld [vmem:[#allocation8 + $0x10] sm:$0xf]
    %v260 = vld [vmem:[#allocation8 + $0x14] sm:$0xf]
    %v261 = vld [vmem:[#allocation8 + $0x18] sm:$0xf]
    %v262 = vld [vmem:[#allocation8 + $0x1c] sm:$0xf]
    %v263 = vld [vmem:[#allocation8 + $0x20] sm:$0xf]
    %v264 = vld [vmem:[#allocation8 + $0x24] sm:$0xf]
    %v265 = vld [vmem:[#allocation8 + $0x28] sm:$0xf]
    %v266 = vld [vmem:[#allocation8 + $0x2c] sm:$0xf]
    %v267 = vld [vmem:[#allocation8 + $0x30] sm:$0xf]
    %v268 = vld [vmem:[#allocation8 + $0x34] sm:$0xf]
    %v269 = vld [vmem:[#allocation8 + $0x38] sm:$0xf]
    %v270 = vld [vmem:[#allocation8 + $0x3c] sm:$0xf]
    %v271 = vpack.c.bf16 %v254, %v254
    %v288 = vunpack.c.l.b16 %v255
    %v289 = vunpack.c.l.b16 %v256
    %v290 = vunpack.c.l.b16 %v257
    %v291 = vunpack.c.l.b16 %v258
    %v292 = vunpack.c.l.b16 %v259
    %v293 = vunpack.c.l.b16 %v260
    %v294 = vunpack.c.l.b16 %v261
    %v295 = vunpack.c.l.b16 %v262
    %v296 = vunpack.c.l.b16 %v263
    %v297 = vunpack.c.l.b16 %v264
    %v298 = vunpack.c.l.b16 %v265
    %v299 = vunpack.c.l.b16 %v266
    %v300 = vunpack.c.l.b16 %v267
    %v301 = vunpack.c.l.b16 %v268
    %v302 = vunpack.c.l.b16 %v269
    %v303 = vunpack.c.l.b16 %v270
    %v304 = vpack.c.b16 %v289, %v288
    %v305 = vpack.c.b16 %v291, %v290
    %v306 = vpack.c.b16 %v293, %v292
    %v307 = vpack.c.b16 %v295, %v294
    %v308 = vpack.c.b16 %v297, %v296
    %v309 = vpack.c.b16 %v299, %v298
    %v310 = vpack.c.b16 %v301, %v300
    %v311 = vpack.c.b16 %v303, %v302
    %320 = vmatpush.bf16.msra.mxu0 %v311
    %321 = vmatpush.bf16.msra.mxu0 %v310
    %322 = vmatpush.bf16.msra.mxu0 %v309
    %323 = vmatpush.bf16.msra.mxu0 %v308
    %324 = vmatpush.bf16.msra.mxu0 %v307
    %325 = vmatpush.bf16.msra.mxu0 %v306
    %326 = vmatpush.bf16.msra.mxu0 %v305
    %327 = vmatpush.bf16.msra.mxu0 %v304
    %328 = vmatmul.bf16.gmra.mxu0 %v271
    %v329 = vpop.f32.mrf.mxu0
    %v330 = vadd.f32 0.0, %v329
    %v331 = vpop.f32.mrf.mxu0
    %332 = vdwg.mxu0
    %333 = vst [vmem:[#allocation10] sm:$0xff] %v330
    // Predicated region
    $region42: #{tpu_custom_call.1} parent=1 // pred_check
      _
    $region43: #{tpu_custom_call.1} parent=1 // pred_check_branch
      %335 = sbr.rel (0) target = $region45
    $region44: #{tpu_custom_call.1} parent=1 // pred_region
      %337 = vsyncadd [#allocation4], 0
      %s339 = sshll.u32 [#allocation10], 4
      %s340 = int_to_ptr.vmem [resolvable:$true] %s339
      %s341 = sshll.u32 %s6, 4
      %s342 = int_to_ptr.hbm [resolvable:$true] %s341
      %344 = dma.vmem_to_hbm [thread:$0]  %s340, 128, %s342, [#allocation4]
    $region45: #{tpu_custom_call.1} parent=1 // pred_fallthru
      _
    // Predicated region
    $region46: #{tpu_custom_call.1} parent=1 // pred_check
      _
    $region47: #{tpu_custom_call.1} parent=1 // pred_check_branch
      %346 = sbr.rel (0) target = $region49
    $region48: #{tpu_custom_call.1} parent=1 // pred_region
      %348 = dma.done [#allocation4], 128
    $region49: #{tpu_custom_call.1} parent=1 // pred_fallthru
      _
    %349 = vsyncpa [#allocation3], 1
    %350 = vsyncpa [#allocation6], 1
    %351 = vsyncpa [#allocation9], 1
    %352 = vsyncpa [#allocation4], 1

</llo_original>
